<compile_context>
chip_gen: v6e
topology: v6e:2x2x1
jax: 0.10.0
libtpu: 0.0.40
codegen_flags: <defaults>
</compile_context>

<pallas_src>
import jax
import jax.numpy as jnp
from jax.experimental import pallas as pl
from jax.experimental.pallas import tpu as pltpu


def _layer_loss_kernel(x_ref, w_ref, b_ref, t_ref, out_ref, acc_ref):
    j = pl.program_id(1)  # spatial (reduction) axis

    @pl.when(j == 0)
    def _():
        acc_ref[...] = jnp.zeros_like(acc_ref)

    # 1x1 conv over NCHW == (C_out, C_in) @ (C_in, L) matmul on the MXU.
    y = jnp.dot(w_ref[...], x_ref[0], preferred_element_type=jnp.float32)
    y = y + b_ref[...]                       # (C_out, 1) broadcast along lanes
    d = y - t_ref[0].astype(jnp.float32)
    acc_ref[...] += d * d                    # pure-VPU accumulate; no XLU in loop

    @pl.when(j == pl.num_programs(1) - 1)
    def _():
        # One cross-lane reduce per batch, replicated across the 128-lane
        # output row (lane-dense store, no masked 1-element writes).
        s = jnp.sum(acc_ref[...])
        out_ref[...] = jnp.broadcast_to(s, out_ref.shape).astype(jnp.float32)


def _choose_tile_l(hw, c_in, c_out, budget_bytes):
    """Largest lane-tile length: a multiple of 128 dividing H*W (or H*W itself),
    with double-buffered x/t tiles + the f32 accumulator within budget."""
    if hw % 128 != 0:
        # TODO(synk): pad / tail-mask spatial tiles when H*W is not a multiple
        # of 128 and too large to use a full-extent block.
        return hw
    # Per lane of tile: x (2 bufs) + t (2 bufs) + acc (1 buf), all f32.
    bytes_per_lane = 4 * (2 * c_in + 3 * c_out)
    max_l = max(128, (budget_bytes // bytes_per_lane) // 128 * 128)
    tile = 128
    cand = 256
    while cand <= min(hw, max_l):
        if hw % cand == 0:
            tile = cand
        cand += 128
    return tile


def layer_loss_forward(f_student, f_teacher, weight, bias,
                       *, vmem_tile_budget_bytes=8 * 1024 * 1024):
    """
    f_student: (N, C_in,  H, W)  NCHW, like the PyTorch module input
    f_teacher: (N, C_out, H, W)  NCHW
    weight:    (C_out, C_in)     1x1 conv weight (kernel dims squeezed)
    bias:      (C_out,)
    returns scalar float32 MSE loss == MSELoss()(Conv2d_1x1(f_student), f_teacher)
    """
    N, C_in, H, W = f_student.shape
    Nt, C_out, Ht, Wt = f_teacher.shape
    assert (N, H, W) == (Nt, Ht, Wt)
    HW = H * W

    # Free reshapes only (no transpose, no extra HBM traffic).
    x = f_student.reshape(N, C_in, HW)
    t = f_teacher.reshape(N, C_out, HW)
    w = weight.astype(jnp.float32)                 # (C_out, C_in), used as-is
    b = bias.reshape(C_out, 1).astype(jnp.float32)  # column, broadcast over lanes

    tile_l = _choose_tile_l(HW, C_in, C_out, vmem_tile_budget_bytes)
    grid = (N, HW // tile_l)
    total_elems = N * C_out * HW                   # MSE mean denominator

    partials = pl.pallas_call(
        _layer_loss_kernel,
        out_shape=jax.ShapeDtypeStruct((N, 1, 128), jnp.float32),
        grid_spec=pltpu.PrefetchScalarGridSpec(
            num_scalar_prefetch=0,
            grid=grid,
            in_specs=[
                pl.BlockSpec((1, C_in, tile_l), lambda i, j: (i, 0, j)),   # x tile
                pl.BlockSpec((C_out, C_in), lambda i, j: (0, 0)),          # weight (resident)
                pl.BlockSpec((C_out, 1), lambda i, j: (0, 0)),             # bias column (resident)
                pl.BlockSpec((1, C_out, tile_l), lambda i, j: (i, 0, j)),  # teacher tile
            ],
            out_specs=pl.BlockSpec((1, 1, 128), lambda i, j: (i, 0, 0)),   # per-batch partial SSE
            scratch_shapes=[pltpu.VMEM((C_out, tile_l), jnp.float32)],     # deferred accumulator
        ),
        compiler_params=pltpu.CompilerParams(
            # batch axis can shard across TensorCores (v7x); spatial axis is
            # the sequential reduction into the per-batch accumulator.
            dimension_semantics=("parallel", "arbitrary"),
        ),
    )(x, w, b, t)

    # Partial SSE per batch is replicated across lanes -> take lane 0, reduce.
    return jnp.sum(partials[:, 0, 0]) / jnp.float32(total_elems)


if __name__ == "__main__":
    # Small shapes consistent with the module's forward.
    N, C_in, C_out, H, W = 2, 4, 8, 16, 16

    key = jax.random.PRNGKey(0)
    k1, k2, k3, k4 = jax.random.split(key, 4)

    f_student = jax.random.normal(k1, (N, C_in, H, W), dtype=jnp.float32)
    f_teacher = jax.random.normal(k2, (N, C_out, H, W), dtype=jnp.float32)

    # Deterministic 1x1 conv parameters (synthetic, not a checkpoint).
    weight = jax.random.normal(k3, (C_out, C_in), dtype=jnp.float32) * 0.1
    bias = jax.random.normal(k4, (C_out,), dtype=jnp.float32) * 0.01

    loss = layer_loss_forward(f_student, f_teacher, weight, bias)
    jax.block_until_ready(loss)

    # Reference check in plain JAX (same math: 1x1 conv + MSE mean).
    y_ref = jnp.einsum("nchw,oc->nohw", f_student, weight) + bias[None, :, None, None]
    ref = jnp.mean((y_ref - f_teacher) ** 2)
    assert jnp.allclose(loss, ref, rtol=1e-5, atol=1e-5), (loss, ref)

    print("KERNEL_OK")
</pallas_src>

<mosaic_0001>
module attributes {stable_mosaic.version = 11 : i64} {
  func.func @_layer_loss_kernel(%arg0: i32, %arg1: i32, %arg2: memref<1x4x256xf32, #tpu.memory_space<vmem>>, %arg3: memref<8x4xf32, #tpu.memory_space<vmem>>, %arg4: memref<8x1xf32, #tpu.memory_space<vmem>>, %arg5: memref<1x8x256xf32, #tpu.memory_space<vmem>>, %arg6: memref<1x1x128xf32, #tpu.memory_space<vmem>>, %arg7: memref<8x256xf32, #tpu.memory_space<vmem>>) attributes {dimension_semantics = [#tpu.dimension_semantics<parallel>, #tpu.dimension_semantics<arbitrary>], iteration_bounds = array<i64: 2, 1>, scalar_prefetch = 0 : i64, scratch_operands = 1 : i64, tpu.core_type = #tpu.core_type<tc>, window_params = [{transform_indices = @transform_0, window_bounds = array<i64: 1, 4, 256>}, {pipeline_mode = #tpu.pipeline_mode<synchronous>, transform_indices = @transform_1, window_bounds = array<i64: 8, 4>}, {pipeline_mode = #tpu.pipeline_mode<synchronous>, transform_indices = @transform_2, window_bounds = array<i64: 8, 1>}, {transform_indices = @transform_3, window_bounds = array<i64: 1, 8, 256>}, {transform_indices = @transform_4, window_bounds = array<i64: 1, 1, 128>}]} {
    %c0_i32 = arith.constant 0 : i32
    %0 = arith.cmpi eq, %arg1, %c0_i32 : i32
    %1 = arith.extui %0 : i1 to i32
    %c0_i32_0 = arith.constant 0 : i32
    %2 = arith.cmpi ne, %1, %c0_i32_0 : i32
    scf.if %2 {
      %cst_16 = arith.constant 0.000000e+00 : f32
      %20 = vector.broadcast %cst_16 : f32 to vector<8x256xf32>
      %c0_17 = arith.constant 0 : index
      %c0_18 = arith.constant 0 : index
      %21 = vector.load %arg7[%c0_17, %c0_18] : memref<8x256xf32, #tpu.memory_space<vmem>>, vector<8x256xf32>
      tpu.vector_store %arg7[%c0_17, %c0_18], %20 {strides = array<i32>} : memref<8x256xf32, #tpu.memory_space<vmem>>, vector<8x256xf32>,
    } else {
    }
    %c0 = arith.constant 0 : index
    %c0_1 = arith.constant 0 : index
    %3 = vector.load %arg3[%c0, %c0_1] : memref<8x4xf32, #tpu.memory_space<vmem>>, vector<8x4xf32>
    %c0_2 = arith.constant 0 : index
    %c0_3 = arith.constant 0 : index
    %c0_4 = arith.constant 0 : index
    %4 = vector.load %arg2[%c0_2, %c0_3, %c0_4] : memref<1x4x256xf32, #tpu.memory_space<vmem>>, vector<1x4x256xf32>
    %5 = vector.shape_cast %4 : vector<1x4x256xf32> to vector<4x256xf32>
    %cst = arith.constant dense<0.000000e+00> : vector<8x256xf32>
    %6 = tpu.matmul %3, %5, %cst {dimension_numbers = #tpu.dot_dimension_numbers<[1], [0], [0], [1], [0, 0, 1, 1], [], []>} : vector<8x4xf32>, vector<4x256xf32>, vector<8x256xf32> -> vector<8x256xf32>
    %c0_5 = arith.constant 0 : index
    %c0_6 = arith.constant 0 : index
    %7 = vector.load %arg4[%c0_5, %c0_6] : memref<8x1xf32, #tpu.memory_space<vmem>>, vector<8x1xf32>
    %8 = vector.broadcast %7 : vector<8x1xf32> to vector<8x256xf32>
    %9 = arith.addf %6, %8 : vector<8x256xf32>
    %c0_7 = arith.constant 0 : index
    %c0_8 = arith.constant 0 : index
    %c0_9 = arith.constant 0 : index
    %10 = vector.load %arg5[%c0_7, %c0_8, %c0_9] : memref<1x8x256xf32, #tpu.memory_space<vmem>>, vector<1x8x256xf32>
    %11 = vector.shape_cast %10 : vector<1x8x256xf32> to vector<8x256xf32>
    %12 = arith.subf %9, %11 : vector<8x256xf32>
    %c0_10 = arith.constant 0 : index
    %c0_11 = arith.constant 0 : index
    %13 = vector.load %arg7[%c0_10, %c0_11] : memref<8x256xf32, #tpu.memory_space<vmem>>, vector<8x256xf32>
    %14 = arith.mulf %12, %12 : vector<8x256xf32>
    %15 = arith.addf %13, %14 : vector<8x256xf32>
    %c0_12 = arith.constant 0 : index
    %c0_13 = arith.constant 0 : index
    %16 = vector.load %arg7[%c0_12, %c0_13] : memref<8x256xf32, #tpu.memory_space<vmem>>, vector<8x256xf32>
    tpu.vector_store %arg7[%c0_12, %c0_13], %15 {strides = array<i32>} : memref<8x256xf32, #tpu.memory_space<vmem>>, vector<8x256xf32>,
    %c0_i32_14 = arith.constant 0 : i32
    %17 = arith.cmpi eq, %arg1, %c0_i32_14 : i32
    %18 = arith.extui %17 : i1 to i32
    %c0_i32_15 = arith.constant 0 : i32
    %19 = arith.cmpi ne, %18, %c0_i32_15 : i32
    scf.if %19 {
      %c0_16 = arith.constant 0 : index
      %c0_17 = arith.constant 0 : index
      %20 = vector.load %arg7[%c0_16, %c0_17] : memref<8x256xf32, #tpu.memory_space<vmem>>, vector<8x256xf32>
      %21 = vector.shape_cast %20 : vector<8x256xf32> to vector<1x8x256xf32>
      %cst_18 = arith.constant dense<0.000000e+00> : vector<1xf32>
      %22 = vector.multi_reduction <add>, %21, %cst_18 [1, 2] : vector<1x8x256xf32> to vector<1xf32>
      %23 = vector.shape_cast %22 : vector<1xf32> to vector<1x1x1xf32>
      %24 = vector.extract %23[0, 0, 0] : f32 from vector<1x1x1xf32>
      %25 = vector.broadcast %24 : f32 to vector<1x1x128xf32>
      %c0_19 = arith.constant 0 : index
      %c0_20 = arith.constant 0 : index
      %c0_21 = arith.constant 0 : index
      %26 = vector.load %arg6[%c0_19, %c0_20, %c0_21] : memref<1x1x128xf32, #tpu.memory_space<vmem>>, vector<1x1x128xf32>
      tpu.vector_store %arg6[%c0_19, %c0_20, %c0_21], %25 {strides = array<i32>} : memref<1x1x128xf32, #tpu.memory_space<vmem>>, vector<1x1x128xf32>,
    } else {
    }
    return
  }
  func.func @transform_0(%arg0: i32, %arg1: i32) -> (i32, i32, i32) {
    %c0_i32 = arith.constant 0 : i32
    %c0_i32_0 = arith.constant 0 : i32
    return %arg0, %c0_i32, %arg1 : i32, i32, i32
  }
  func.func @transform_1(%arg0: i32, %arg1: i32) -> (i32, i32) {
    %c0_i32 = arith.constant 0 : i32
    %c0_i32_0 = arith.constant 0 : i32
    %c0_i32_1 = arith.constant 0 : i32
    return %c0_i32, %c0_i32_0 : i32, i32
  }
  func.func @transform_2(%arg0: i32, %arg1: i32) -> (i32, i32) {
    %c0_i32 = arith.constant 0 : i32
    %c0_i32_0 = arith.constant 0 : i32
    %c0_i32_1 = arith.constant 0 : i32
    return %c0_i32, %c0_i32_0 : i32, i32
  }
  func.func @transform_3(%arg0: i32, %arg1: i32) -> (i32, i32, i32) {
    %c0_i32 = arith.constant 0 : i32
    %c0_i32_0 = arith.constant 0 : i32
    return %arg0, %c0_i32, %arg1 : i32, i32, i32
  }
  func.func @transform_4(%arg0: i32, %arg1: i32) -> (i32, i32, i32) {
    %c0_i32 = arith.constant 0 : i32
    %c0_i32_0 = arith.constant 0 : i32
    %c0_i32_1 = arith.constant 0 : i32
    return %arg0, %c0_i32, %c0_i32_0 : i32, i32, i32
  }
}

</mosaic_0001>

<llo_original>
// kernel: tpu_custom_call.1
$region0: #{tpu_custom_call.1}
  #allocation0 [shape = 'u32[]', space=smem, size = 0x4, offset = 0x4, fixed_abs, tag = 'smem constant byte address 0x4 - core index']
  #allocation1 [shape = 'u32[144,128]{1,0:T(1,128)}', space=vmem, size = 0x12000, scoped, tag = 'internal scratch']
  #allocation2 [shape = 'f32[8,256]{1,0:T(8,128)}', space=vmem, size = 0x2000, scoped, tag = 'scratch operand']
  %s0 = inlined_call_operand.vmem [shape: f32[2,4,256], index: 0, kind: input, shape index: {}]
  %s1 = inlined_call_operand.vmem [shape: f32[8,4], index: 1, kind: input, shape index: {}]
  %s2 = inlined_call_operand.vmem [shape: f32[8,1], index: 2, kind: input, shape index: {}]
  %s3 = inlined_call_operand.hbm [shape: f32[2,8,256], index: 3, kind: input, shape index: {}]
  %s4 = inlined_call_operand.hbm [shape: f32[2,1,128], index: 4, kind: output, shape index: {}]
  %s5 = sld [smem:[#allocation0]]
  $region61: #{tpu_custom_call.1} parent=0
    _
  %s7 = ssub.s32 1, %s5
  %s8 = scalar_select 0, %s7, %s5
  $region1: #{tpu_custom_call.1} parent=0
    #allocation3 [shape = 'u8[16384]{0}', space=vmem, size = 0x4000, scoped, tag = 'input window, operand 3']
    #allocation4 [shape = 's32[2]{0}', space=sflag, size = 0x8, scoped, tag = 'scoped memory for tpu_custom_call.1']
    #allocation5 [shape = 's32[2]{0}', space=sflag, size = 0x8, scoped, tag = 'scoped memory for tpu_custom_call.1']
    #allocation6 [shape = 'u8[1024]{0}', space=vmem, size = 0x400, scoped, tag = 'output window, operand 0']
    %9 = vsyncpa [#allocation4], 0
    %s10 = scalar_lea.sflag [#allocation4], 1
    %11 = vsyncpa %s10, 0
    %12 = vsyncpa [#allocation5], 0
    %s13 = scalar_lea.sflag [#allocation5], 1
    %14 = vsyncpa %s13, 0
    loop: start=0, step=1, limit=4
    $region2: #{tpu_custom_call.1} parent=1 // loop_pre_header
      _
    $region3: #{tpu_custom_call.1} parent=1 // loop_header
      %s16 = sphi 0, %s20
      %p17 = scmp.ge.s32.totalorder %s16, 4
      %s23 = sphi 0, %s35
      %s24 = sphi 0, %s31
      %s25 = sphi 0, %s23
      %s26 = sphi 0, %s24
      %s27 = sphi 0, %s25
      %s28 = sphi 0, %s26
      %s40 = sphi 0, %s42
      %s43 = sphi 0, %s40
      %s44 = sphi 0, %s43
      %s60 = sphi 0, %s44
      %s64 = sphi 0, %s64
      %s66 = sphi 0, %s64
      %s67 = sphi 0, %s66
      %s81 = sphi 0, %s67
      %s85 = sphi 0, %s85
      %s87 = sphi 0, %s85
      %s88 = sphi 0, %s87
      %s102 = sphi 0, %s88
      %s110 = sphi 0, %s112
      %s113 = sphi 0, %s110
      %s114 = sphi 0, %s113
      %s130 = sphi 0, %s114
      %s136 = sphi 0, %s138
      %s139 = sphi 0, %s136
      %s140 = sphi 0, %s139
      %s156 = sphi 0, %s140
    $region4: #{tpu_custom_call.1} parent=1 // loop_header_branch
      %19 = sbr.rel (%p17) target = $region8
    $region5: #{tpu_custom_call.1} parent=1 // loop_body
      %s21 = ssub.s32 %s16, 1
      %s22 = ssub.s32 %s16, 2
      %s29 = sadd.s32 1, %s24
      %p30 = scmp.ge.s32.totalorder %s29, 1
      %s31 = scalar_select %p30, 0, %s29
      %s32 = sadd.s32 1, %s23
      %s33 = scalar_select %p30, %s32, %s23
      %p34 = scmp.ge.s32.totalorder %s33, 2
      %s35 = scalar_select %p34, 0, %s33
      %s36 = ssub.s32 %s23, %s35
      %s37 = ssub.s32 %s24, %s31
      %s38 = sor.u32 %s36, %s37
      %p39 = scmp.eq.s32.totalorder %s38, 0
      %s41 = sadd.s32 %s40, 1
      %s42 = scalar_select %p39, %s40, %s41
      %p45 = pneg %p39
      %p46 = scmp.eq.s32.totalorder %s16, 1
      %p47 = por %p45, %p46
      %p48 = scmp.ne.s32.totalorder %s40, %s43
      %p49 = scmp.eq.s32.totalorder %s16, 0
      %p50 = por %p48, %p49
      %p51 = scmp.ne.s32.totalorder %s40, %s43
      %p52 = scmp.eq.s32.totalorder %s21, 1
      %p53 = por %p51, %p52
      %p54 = scmp.ne.s32.totalorder %s43, %s44
      %p55 = scmp.eq.s32.totalorder %s21, 0
      %p56 = por %p54, %p55
      %p57 = scmp.ne.s32.totalorder %s43, %s44
      %p58 = scmp.eq.s32.totalorder %s22, 1
      %p59 = por %p57, %p58
      %p61 = scmp.ne.s32.totalorder %s44, %s60
      %p62 = scmp.eq.s32.totalorder %s22, 0
      %p63 = por %p61, %p62
      %s65 = sadd.s32 %s64, 1
      %p68 = scmp.eq.s32.totalorder %s16, 1
      %p69 = scmp.ne.s32.totalorder %s64, %s66
      %p70 = scmp.eq.s32.totalorder %s16, 0
      %p71 = por %p69, %p70
      %p72 = scmp.ne.s32.totalorder %s64, %s66
      %p73 = scmp.eq.s32.totalorder %s21, 1
      %p74 = por %p72, %p73
      %p75 = scmp.ne.s32.totalorder %s66, %s67
      %p76 = scmp.eq.s32.totalorder %s21, 0
      %p77 = por %p75, %p76
      %p78 = scmp.ne.s32.totalorder %s66, %s67
      %p79 = scmp.eq.s32.totalorder %s22, 1
      %p80 = por %p78, %p79
      %p82 = scmp.ne.s32.totalorder %s67, %s81
      %p83 = scmp.eq.s32.totalorder %s22, 0
      %p84 = por %p82, %p83
      %s86 = sadd.s32 %s85, 1
      %p89 = scmp.eq.s32.totalorder %s16, 1
      %p90 = scmp.ne.s32.totalorder %s85, %s87
      %p91 = scmp.eq.s32.totalorder %s16, 0
      %p92 = por %p90, %p91
      %p93 = scmp.ne.s32.totalorder %s85, %s87
      %p94 = scmp.eq.s32.totalorder %s21, 1
      %p95 = por %p93, %p94
      %p96 = scmp.ne.s32.totalorder %s87, %s88
      %p97 = scmp.eq.s32.totalorder %s21, 0
      %p98 = por %p96, %p97
      %p99 = scmp.ne.s32.totalorder %s87, %s88
      %p100 = scmp.eq.s32.totalorder %s22, 1
      %p101 = por %p99, %p100
      %p103 = scmp.ne.s32.totalorder %s88, %s102
      %p104 = scmp.eq.s32.totalorder %s22, 0
      %p105 = por %p103, %p104
      %s106 = ssub.s32 %s23, %s35
      %s107 = ssub.s32 %s24, %s31
      %s108 = sor.u32 %s106, %s107
      %p109 = scmp.eq.s32.totalorder %s108, 0
      %s111 = sadd.s32 %s110, 1
      %s112 = scalar_select %p109, %s110, %s111
      %p115 = pneg %p109
      %p116 = scmp.eq.s32.totalorder %s16, 1
      %p117 = por %p115, %p116
      %p118 = scmp.ne.s32.totalorder %s110, %s113
      %p119 = scmp.eq.s32.totalorder %s16, 0
      %p120 = por %p118, %p119
      %p121 = scmp.ne.s32.totalorder %s110, %s113
      %p122 = scmp.eq.s32.totalorder %s21, 1
      %p123 = por %p121, %p122
      %p124 = scmp.ne.s32.totalorder %s113, %s114
      %p125 = scmp.eq.s32.totalorder %s21, 0
      %p126 = por %p124, %p125
      %p127 = scmp.ne.s32.totalorder %s113, %s114
      %p128 = scmp.eq.s32.totalorder %s22, 1
      %p129 = por %p127, %p128
      %p131 = scmp.ne.s32.totalorder %s114, %s130
      %p132 = scmp.eq.s32.totalorder %s22, 0
      %p133 = por %p131, %p132
      %s134 = ssub.s32 %s23, %s35
      %p135 = scmp.eq.s32.totalorder %s134, 0
      %s137 = sadd.s32 %s136, 1
      %s138 = scalar_select %p135, %s136, %s137
      %p141 = pneg %p135
      %p142 = scmp.eq.s32.totalorder %s16, 1
      %p143 = por %p141, %p142
      %p144 = scmp.ne.s32.totalorder %s136, %s139
      %p145 = scmp.eq.s32.totalorder %s16, 0
      %p146 = por %p144, %p145
      %p147 = scmp.ne.s32.totalorder %s136, %s139
      %p148 = scmp.eq.s32.totalorder %s21, 1
      %p149 = por %p147, %p148
      %p150 = scmp.ne.s32.totalorder %s139, %s140
      %p151 = scmp.eq.s32.totalorder %s21, 0
      %p152 = por %p150, %p151
      %p153 = scmp.ne.s32.totalorder %s139, %s140
      %p154 = scmp.eq.s32.totalorder %s22, 1
      %p155 = por %p153, %p154
      %p157 = scmp.ne.s32.totalorder %s140, %s156
      %p158 = scmp.eq.s32.totalorder %s22, 0
      %p159 = por %p157, %p158
      %p160 = scmp.le.s32.totalorder 1, %s16
      %p161 = scmp.lt.s32.totalorder %s16, 3
      %p162 = pnand %p160, %p161
      %p163 = pneg %p162
      // Predicated region
      $region9: #{tpu_custom_call.1} parent=5 // pred_check
        _
      $region10: #{tpu_custom_call.1} parent=5 // pred_check_branch
        %165 = sbr.rel (%p162) target = $region12
      $region11: #{tpu_custom_call.1} parent=5 // pred_region
        %s166 = ssub.s32 %s16, 1
        // Predicated region
        $region13: #{tpu_custom_call.1} parent=11 // pred_check
          %p167 = pneg %p77
        $region14: #{tpu_custom_call.1} parent=11 // pred_check_branch
          %169 = sbr.rel (%p167) target = $region16
        $region15: #{tpu_custom_call.1} parent=11 // pred_region
          _
        $region16: #{tpu_custom_call.1} parent=11 // pred_fallthru
          _
        // Predicated region
        $region17: #{tpu_custom_call.1} parent=11 // pred_check
          %p170 = pneg %p98
        $region18: #{tpu_custom_call.1} parent=11 // pred_check_branch
          %172 = sbr.rel (%p170) target = $region20
        $region19: #{tpu_custom_call.1} parent=11 // pred_region
          _
        $region20: #{tpu_custom_call.1} parent=11 // pred_fallthru
          _
      $region12: #{tpu_custom_call.1} parent=5 // pred_fallthru
        _
      %p173 = scmp.lt.s32.totalorder %s16, 2
      // Predicated region
      $region21: #{tpu_custom_call.1} parent=5 // pred_check
        %p174 = pneg %p173
      $region22: #{tpu_custom_call.1} parent=5 // pred_check_branch
        %176 = sbr.rel (%p174) target = $region24
      $region23: #{tpu_custom_call.1} parent=5 // pred_region
        // Predicated region
        $region25: #{tpu_custom_call.1} parent=23 // pred_check
          %p177 = pneg %p50
        $region26: #{tpu_custom_call.1} parent=23 // pred_check_branch
          %179 = sbr.rel (%p177) target = $region28
        $region27: #{tpu_custom_call.1} parent=23 // pred_region
          %s180 = smul.u32 2, %s24
          %p181 = scmp.lt.s32.totalorder %s23, 1
          %s182 = scalar_select %p181, %s23, 1
          %p183 = scmp.lt.s32.totalorder %s180, 1
          %s184 = scalar_select %p183, %s180, 1
          %s185 = smul.addr %s182, 2
          %s186 = sadd.s32 %s184, %s185
          %s187 = smul.addr %s186, 4
          %s188 = scalar_lea.vmem %s0, %s187
          %s189 = smul.u32 2, %s24
        $region28: #{tpu_custom_call.1} parent=23 // pred_fallthru
          _
        // Predicated region
        $region29: #{tpu_custom_call.1} parent=23 // pred_check
          %p190 = pneg %p120
        $region30: #{tpu_custom_call.1} parent=23 // pred_check_branch
          %192 = sbr.rel (%p190) target = $region32
        $region31: #{tpu_custom_call.1} parent=23 // pred_region
          %s193 = sand.u32 %s110, 1
          %s194 = scalar_lea.sflag [#allocation4], %s193
          %s195 = sand.u32 %s110, 1
          %s196 = smul.addr %s195, 16
          %s197 = scalar_lea.vmem [#allocation3], %s196
          %s198 = smul.u32 2, %s24
          %s200 = ssub.s32 256, 256
          %201 = vsyncadd %s194, %s200
          %s202 = smul.addr %s23, 2
          %s203 = sadd.s32 %s198, %s202
          %s204 = smul.addr %s203, 128
          %s205 = scalar_lea.hbm %s3, %s204
          %s207 = sshll.u32 %s197, 4
          %s208 = int_to_ptr.vmem [resolvable:$true] %s207
          %210 = dma.hbm_to_vmem [thread:$0]  %s205, 256, %s208, %s194
        $region32: #{tpu_custom_call.1} parent=23 // pred_fallthru
          _
      $region24: #{tpu_custom_call.1} parent=5 // pred_fallthru
        _
      %p211 = scmp.le.s32.totalorder 1, %s16
      %p212 = scmp.lt.s32.totalorder %s16, 3
      %p213 = pnand %p211, %p212
      %p214 = pneg %p213
      // Predicated region
      $region33: #{tpu_custom_call.1} parent=5 // pred_check
        _
      $region34: #{tpu_custom_call.1} parent=5 // pred_check_branch
        %216 = sbr.rel (%p213) target = $region36
      $region35: #{tpu_custom_call.1} parent=5 // pred_region
        %s217 = ssub.s32 %s16, 1
        %s218 = sand.u32 %s113, 1
        %s219 = scalar_lea.sflag [#allocation4], %s218
        %s220 = sand.u32 %s113, 1
        %s221 = smul.addr %s220, 16
        %s222 = scalar_lea.vmem [#allocation3], %s221
        // Predicated region
        $region37: #{tpu_custom_call.1} parent=35 // pred_check
          %p223 = pneg %p126
        $region38: #{tpu_custom_call.1} parent=35 // pred_check_branch
          %225 = sbr.rel (%p223) target = $region40
        $region39: #{tpu_custom_call.1} parent=35 // pred_region
          %226 = dma.done %s219, 256
        $region40: #{tpu_custom_call.1} parent=35 // pred_fallthru
          _
        %s227 = smul.u32 2, %s26
        %p228 = scmp.lt.s32.totalorder %s25, 1
        %s229 = scalar_select %p228, %s25, 1
        %p230 = scmp.lt.s32.totalorder %s227, 1
        %s231 = scalar_select %p230, %s227, 1
        %s232 = smul.addr %s229, 2
        %s233 = sadd.s32 %s231, %s232
        %s234 = smul.addr %s233, 4
        %s235 = scalar_lea.vmem %s0, %s234
        %p236 = pneg %p56
        %p237 = pneg %p53
        %p238 = pneg %p77
        %p239 = pneg %p74
        %p240 = pneg %p98
        %p241 = pneg %p95
        %s242 = sand.u32 %s113, 1
        %s243 = scalar_lea.sflag [#allocation4], %s242
        %s244 = sand.u32 %s113, 1
        %s245 = smul.addr %s244, 16
        %s246 = scalar_lea.vmem [#allocation3], %s245
        %p247 = pneg %p126
        %p248 = pneg %p123
        %p249 = pneg %p152
        %p250 = pneg %p149
        %s251 = sand.u32 %s139, 1
        %s252 = scalar_lea.sflag [#allocation5], %s251
        %s253 = sand.u32 %s139, 1
        %s254 = scalar_lea.vmem [#allocation6], %s253
        %s255 = smul.u32 2, %s26
        %p256 = scmp.lt.s32.totalorder %s25, 1
        %s257 = scalar_select %p256, %s25, 1
        %p258 = scmp.lt.s32.totalorder %s255, 1
        %s259 = scalar_select %p258, %s255, 1
        %s260 = smul.addr %s257, 2
        %s261 = sadd.s32 %s259, %s260
        %s262 = smul.addr %s261, 4
        %s263 = scalar_lea.vmem %s0, %s262
        %s264 = smul.u32 2, %s26
        %s265 = smul.u32 2, %s26
        %p266 = scmp.eq.s32.totalorder %s26, 0
        // Predicated region
        $region41: #{tpu_custom_call.1} parent=35 // pred_check
          %p267 = pneg %p266
        $region42: #{tpu_custom_call.1} parent=35 // pred_check_branch
          %269 = sbr.rel (%p267) target = $region44
        $region43: #{tpu_custom_call.1} parent=35 // pred_region
          %270 = vst [vmem:[#allocation2] sm:$0xff] 0.0
          %271 = vst [vmem:[#allocation2 + $0x8] sm:$0xff] 0.0
        $region44: #{tpu_custom_call.1} parent=35 // pred_fallthru
          _
        %v272 = vld [vmem:[%s1] sm:$0xff]
        %v273 = vld [vmem:[%s263] sm:$0xff]
        %v274 = vld [vmem:[%s2] sm:$0xff]
        %276 = vset.pattern.permute.xlu0 0
        %277 = vperm.xlu0 %276, %v274
        %v278 = vpop.permute.xlu0 %277
        %v281 = vcombine.high %v273, %v273
        %vm282 = vcmask 31744
        %v284 = vsel %vm282, %v272, 0
        %vm286 = vcmask 1043456
        %v287 = vsel %vm286, %v273, 0
        %v289 = vsel %vm286, %v281, 0
        %291 = vmatprep.subr.mxu0 0.0
        %292 = vmatpush1.msra.mxu0 0.0
        %293 = vmatprep.subr.mxu0 0.0
        %294 = vmatpush1.msra.mxu0 0.0
        %295 = vmatprep.subr.mxu0 0.0
        %296 = vmatpush1.msra.mxu0 0.0
        %297 = vmatprep.subr.mxu0 0.0
        %298 = vmatpush1.msra.mxu0 0.0
        %299 = vmatprep.subr.mxu0 0.0
        %300 = vmatpush1.msra.mxu0 0.0
        %301 = vmatprep.subr.mxu0 0.0
        %302 = vmatpush1.msra.mxu0 0.0
        %303 = vmatprep.subr.mxu0 0.0
        %304 = vmatpush1.msra.mxu0 0.0
        %305 = vmatprep.subr.mxu0 0.0
        %306 = vmatpush1.msra.mxu0 0.0
        %307 = vmatprep.subr.mxu0 0.0
        %308 = vmatpush1.msra.mxu0 0.0
        %309 = vmatprep.subr.mxu0 0.0
        %310 = vmatpush1.msra.mxu0 0.0
        %311 = vmatprep.subr.mxu0 0.0
        %312 = vmatpush1.msra.mxu0 0.0
        %313 = vmatprep.subr.mxu0 0.0
        %314 = vmatpush1.msra.mxu0 0.0
        %315 = vmatprep.subr.mxu0 0.0
        %316 = vmatpush1.msra.mxu0 0.0
        %317 = vmatprep.subr.mxu0 0.0
        %318 = vmatpush1.msra.mxu0 0.0
        %319 = vmatprep.subr.mxu0 0.0
        %320 = vmatpush1.msra.mxu0 0.0
        %321 = vmatprep.subr.mxu0 %v289
        %322 = vmatpush1.msra.mxu0 %v287
        %323 = vmatprep.subr.mxu0 0.0
        %324 = vmatpush2.msra.mxu0 0.0
        %325 = vmatprep.subr.mxu0 0.0
        %326 = vmatpush2.msra.mxu0 0.0
        %327 = vmatprep.subr.mxu0 0.0
        %328 = vmatpush2.msra.mxu0 0.0
        %329 = vmatprep.subr.mxu0 0.0
        %330 = vmatpush2.msra.mxu0 0.0
        %331 = vmatprep.subr.mxu0 0.0
        %332 = vmatpush2.msra.mxu0 0.0
        %333 = vmatprep.subr.mxu0 0.0
        %334 = vmatpush2.msra.mxu0 0.0
        %335 = vmatprep.subr.mxu0 0.0
        %336 = vmatpush2.msra.mxu0 0.0
        %337 = vmatprep.subr.mxu0 0.0
        %338 = vmatpush2.msra.mxu0 0.0
        %339 = vmatprep.subr.mxu0 0.0
        %340 = vmatpush2.msra.mxu0 0.0
        %341 = vmatprep.subr.mxu0 0.0
        %342 = vmatpush2.msra.mxu0 0.0
        %343 = vmatprep.subr.mxu0 0.0
        %344 = vmatpush2.msra.mxu0 0.0
        %345 = vmatprep.subr.mxu0 0.0
        %346 = vmatpush2.msra.mxu0 0.0
        %347 = vmatprep.subr.mxu0 0.0
        %348 = vmatpush2.msra.mxu0 0.0
        %349 = vmatprep.subr.mxu0 0.0
        %350 = vmatpush2.msra.mxu0 0.0
        %351 = vmatprep.subr.mxu0 0.0
        %352 = vmatpush2.msra.mxu0 0.0
        %353 = vmatprep.subr.mxu0 0.0
        %354 = vmatpush2.msra.mxu0 0.0
        %355 = vmatprep.mubr.f32.mxu0 0.0
        %356 = vmatmul.mubr.f32.gmra.mxu0 %v284
        %v357 = vpop.f32.mrf.mxu0
        %v358 = vadd.f32 %v278, %v357
        %v359 = vpop.f32.mrf.mxu0
        %v360 = vadd.f32 %v278, %v359
        %361 = vdwg.mxu0
        %v362 = vld [vmem:[%s222] sm:$0xff]
        %v363 = vld [vmem:[%s222 + $0x8] sm:$0xff]
        %v364 = vsub.f32 %v358, %v362
        %v365 = vsub.f32 %v360, %v363
        %v366 = vld [vmem:[#allocation2] sm:$0xff]
        %v367 = vld [vmem:[#allocation2 + $0x8] sm:$0xff]
        %v368 = vmul.f32 %v364, %v364
        %v369 = vmul.f32 %v365, %v365
        %v370 = vadd.f32 %v366, %v368
        %v371 = vadd.f32 %v367, %v369
        %372 = vst [vmem:[#allocation2] sm:$0xff] %v370
        %373 = vst [vmem:[#allocation2 + $0x8] sm:$0xff] %v371
        // Predicated region
        $region45: #{tpu_custom_call.1} parent=35 // pred_check
          %p374 = pneg %p266
        $region46: #{tpu_custom_call.1} parent=35 // pred_check_branch
          %376 = sbr.rel (%p374) target = $region48
        $region47: #{tpu_custom_call.1} parent=35 // pred_region
          %v377 = vld [vmem:[#allocation2] sm:$0xff]
          %v378 = vld [vmem:[#allocation2 + $0x8] sm:$0xff]
          %v379 = vadd.f32 %v377, %v378
          %380 = vadd.xlane.f32.xlu0 %v379
          %v381 = vpop.xlane.xlu0 %380
          %v382 = vrot.slane %v381, 4
          %v383 = vadd.f32 %v381, %v382
          %v384 = vrot.slane %v383, 2
          %v385 = vadd.f32 %v383, %v384
          %v386 = vrot.slane %v385, 1
          %v387 = vadd.f32 %v385, %v386
          %s388 = vtos %v387
          %v389 = vstv %s388
          %390 = vst [vmem:[%s254] sm:$0x1] %v389
        $region48: #{tpu_custom_call.1} parent=35 // pred_fallthru
          _
        %s391 = sand.u32 %s139, 1
        %s392 = scalar_lea.sflag [#allocation5], %s391
        %s393 = sand.u32 %s139, 1
        %s394 = scalar_lea.vmem [#allocation6], %s393
        // Predicated region
        $region49: #{tpu_custom_call.1} parent=35 // pred_check
          %p395 = pneg %p149
        $region50: #{tpu_custom_call.1} parent=35 // pred_check_branch
          %397 = sbr.rel (%p395) target = $region52
        $region51: #{tpu_custom_call.1} parent=35 // pred_region
          %s399 = ssub.s32 16, 16
          %400 = vsyncadd %s392, %s399
          %s401 = smul.addr %s25, 16
          %s402 = scalar_lea.hbm %s4, %s401
          %s404 = sshll.u32 %s394, 4
          %s405 = int_to_ptr.vmem [resolvable:$true] %s404
          %407 = dma.vmem_to_hbm [thread:$0]  %s405, 16, %s402, %s392
        $region52: #{tpu_custom_call.1} parent=35 // pred_fallthru
          _
      $region36: #{tpu_custom_call.1} parent=5 // pred_fallthru
        _
      %p408 = scmp.le.s32.totalorder 2, %s16
      // Predicated region
      $region53: #{tpu_custom_call.1} parent=5 // pred_check
        %p409 = pneg %p408
      $region54: #{tpu_custom_call.1} parent=5 // pred_check_branch
        %411 = sbr.rel (%p409) target = $region56
      $region55: #{tpu_custom_call.1} parent=5 // pred_region
        %s412 = ssub.s32 %s16, 2
        // Predicated region
        $region57: #{tpu_custom_call.1} parent=55 // pred_check
          %p413 = pneg %p155
        $region58: #{tpu_custom_call.1} parent=55 // pred_check_branch
          %415 = sbr.rel (%p413) target = $region60
        $region59: #{tpu_custom_call.1} parent=55 // pred_region
          %s416 = sand.u32 %s140, 1
          %s417 = scalar_lea.sflag [#allocation5], %s416
          %s418 = sand.u32 %s140, 1
          %s419 = scalar_lea.vmem [#allocation6], %s418
          %420 = dma.done %s417, 16
        $region60: #{tpu_custom_call.1} parent=55 // pred_fallthru
          _
      $region56: #{tpu_custom_call.1} parent=5 // pred_fallthru
        _
    $region6: #{tpu_custom_call.1} parent=1 // loop_footer
      %s20 = sadd.s32 1, %s16
    $region7: #{tpu_custom_call.1} parent=1 // loop_footer_branch
      %15 = sbr.rel target = $region3
    $region8: #{tpu_custom_call.1} parent=1 // loop_exit
      _
    %421 = vsyncpa [#allocation4], 1
    %s422 = scalar_lea.sflag [#allocation4], 1
    %423 = vsyncpa %s422, 1
    %424 = vsyncpa [#allocation5], 1
    %s425 = scalar_lea.sflag [#allocation5], 1
    %426 = vsyncpa %s425, 1

</llo_original>
